<compile_context>
chip_gen: v7x
topology: tpu7x:2x2x1
jax: 0.10.0
libtpu: 0.0.40
codegen_flags: <defaults>
</compile_context>

<pallas_src>
import jax
import jax.numpy as jnp
from jax.experimental import pallas as pl
from jax.experimental.pallas import tpu as pltpu

# ---- model hyper-parameters (small, consistent with the module) ----
OBS_DIM = 16
ACTION_DIM = 2
HORIZON = 10
HIDDEN = 32
N_LAYERS = 2
N_HEADS = 2                        # unused numerically: seq_len==1 => attn == V proj
AH = ACTION_DIM * HORIZON          # 20
ACT_T = AH + 1                     # 21 : [noisy_action_seq, timestep] folded together
IN_DIM = HIDDEN + ACT_T            # 53 : input_proj contraction dim
FF = HIDDEN * 4                    # 128
OUT_PAD = 128                      # lane-dense padded output width
BATCH = 8


def _r8(n):
    return -(-n // 8) * 8


ACT_T_PAD = _r8(ACT_T)             # 24 (sublane-aligned contraction for the act/t part)

# ---------------- W32 slab layout (lanes = HIDDEN = 32), static row offsets --------------
O_W1 = 0                                           # (OBS_DIM, H)
O_W2 = O_W1 + _r8(OBS_DIM)                         # 16  (H, H)
O_WPO = O_W2 + _r8(HIDDEN)                         # 48  (H, H)   input_proj, obs part
O_WPA = O_WPO + _r8(HIDDEN)                        # 80  (ACT_T_PAD, H) input_proj, act/t part
O_LMAT = O_WPA + ACT_T_PAD                         # 104 per-layer matrices base
LMAT_STRIDE = HIDDEN + FF                          # 160 : [W_vo (H rows), FF2_W (FF rows)]
O_VEC = O_LMAT + N_LAYERS * LMAT_STRIDE            # 424 1-row vectors start here
O_B1 = O_VEC + 0
O_B2 = O_VEC + 1
O_BP = O_VEC + 2
O_LVEC = O_VEC + 3                                 # per-layer vectors base
LVEC_STRIDE = 6                                    # b_vo, ln1_g, ln1_b, ff2_b, ln2_g, ln2_b
W32_ROWS = _r8(O_LVEC + N_LAYERS * LVEC_STRIDE)    # 440

# ---------------- W128 slab layout (lanes = FF = OUT_PAD = 128) ---------------------------
assert FF == OUT_PAD
O_FF1W = 0                                         # per layer: l*HIDDEN rows
O_OUTW = N_LAYERS * HIDDEN                         # 64  (H, 128) out_w (LN-folded, padded)
O_FF1B = O_OUTW + HIDDEN                           # 96  per-layer ff1 bias rows
O_OUTB = O_FF1B + N_LAYERS                         # 98  out bias row
W128_ROWS = _r8(O_OUTB + 1)                        # 104


# ------------------------------ kernel helpers -------------------------------
def _gelu(x):
    # exact GELU: 0.5 * x * (1 + erf(x / sqrt(2)))  -- matches F.gelu default
    return 0.5 * x * (1.0 + jax.lax.erf(x * 0.7071067811865476))


def _add_ln(x, res, g, b, eps=1e-5):
    # fused residual add + LayerNorm (two-pass moments for robustness)
    y = x + res
    mu = jnp.mean(y, axis=-1, keepdims=True)
    d = y - mu
    var = jnp.mean(d * d, axis=-1, keepdims=True)
    yn = d * jax.lax.rsqrt(var + eps)
    if g is not None:
        yn = yn * g + b
    return yn


# --------------------------------- kernel ------------------------------------
def diffusion_policy_kernel(obs_ref, act_t_ref, w32_ref, w128_ref, o_ref):
    f32 = jnp.float32
    bf16 = jnp.bfloat16

    def dot_bf16(x, w_bf16):
        # bf16 MXU operands, f32 accumulation
        return jnp.dot(x.astype(bf16), w_bf16, preferred_element_type=f32)

    def vec32(row):
        return w32_ref[row:row + 1, :].astype(f32)

    # obs_encoder: Linear -> GELU -> Linear -> GELU
    h = _gelu(dot_bf16(obs_ref[...], w32_ref[O_W1:O_W1 + OBS_DIM, :]) + vec32(O_B1))
    obs_feat = _gelu(dot_bf16(h, w32_ref[O_W2:O_W2 + HIDDEN, :]) + vec32(O_B2))

    # input_proj(concat([obs_feat, act, t])) == split contraction (no lane concat)
    x = (dot_bf16(obs_feat, w32_ref[O_WPO:O_WPO + HIDDEN, :])
         + dot_bf16(act_t_ref[...], w32_ref[O_WPA:O_WPA + ACT_T_PAD, :])
         + vec32(O_BP))

    # TransformerEncoder (post-norm), seq_len == 1:
    # softmax over a single key == 1 => attention output == out_proj(V);
    # V-projection and out_proj are pre-composed host-side into a single W_vo dot.
    for l in range(N_LAYERS):
        mb = O_LMAT + l * LMAT_STRIDE
        vb = O_LVEC + l * LVEC_STRIDE

        attn = dot_bf16(x, w32_ref[mb:mb + HIDDEN, :]) + vec32(vb + 0)
        x = _add_ln(x, attn, vec32(vb + 1), vec32(vb + 2))

        ff = _gelu(dot_bf16(x, w128_ref[O_FF1W + l * HIDDEN:O_FF1W + (l + 1) * HIDDEN, :])
                   + w128_ref[O_FF1B + l:O_FF1B + l + 1, :].astype(f32))
        ff = dot_bf16(ff, w32_ref[mb + HIDDEN:mb + HIDDEN + FF, :]) + vec32(vb + 3)

        if l < N_LAYERS - 1:
            x = _add_ln(x, ff, vec32(vb + 4), vec32(vb + 5))
        else:
            # final LN affine was folded into out_w / out_b host-side
            x = _add_ln(x, ff, None, None)

    # lane-dense 128-wide output slab (zero-padded weights => padded lanes are 0)
    out = (dot_bf16(x, w128_ref[O_OUTW:O_OUTW + HIDDEN, :])
           + w128_ref[O_OUTB:O_OUTB + 1, :].astype(f32))
    o_ref[...] = out.astype(o_ref.dtype)


# -------------------------------- host-side packing ---------------------------
def _pack_kernel_params(params):
    """Pack all weights into two contiguous slabs (bf16 MXU operands)."""
    (w1, b1, w2, b2, wp, bp,
     qkv_w, qkv_b, ao_w, ao_b,
     l1g, l1b, f1w, f1b, f2w, f2b, l2g, l2b,
     ow, ob) = params

    wp_obs = wp[:HIDDEN, :]                                   # (H, H)
    wp_act = wp[HIDDEN:, :]                                   # (ACT_T, H)

    # seq_len==1: attention == out_proj(V)  =>  pre-compose V and out_proj
    v_w = qkv_w[:, :, 2 * HIDDEN:3 * HIDDEN]                  # (L, H, H) PyTorch [Q;K;V]
    v_b = qkv_b[:, :, 2 * HIDDEN:3 * HIDDEN]                  # (L, 1, H)
    w_vo = jnp.einsum('lij,ljk->lik', v_w, ao_w)              # (L, H, H)
    b_vo = jnp.einsum('lrj,ljk->lrk', v_b, ao_w) + ao_b       # (L, 1, H)

    # fold the last layer's LN2 affine into the output projection
    g_last = l2g[N_LAYERS - 1][0]                             # (H,)
    b_last = l2b[N_LAYERS - 1]                                # (1, H)
    ow_f = g_last[:, None] * ow                               # (H, AH)
    ob_f = b_last @ ow + ob                                   # (1, AH)

    w32 = jnp.zeros((W32_ROWS, HIDDEN), jnp.float32)
    w32 = w32.at[O_W1:O_W1 + OBS_DIM].set(w1)
    w32 = w32.at[O_W2:O_W2 + HIDDEN].set(w2)
    w32 = w32.at[O_WPO:O_WPO + HIDDEN].set(wp_obs)
    w32 = w32.at[O_WPA:O_WPA + ACT_T].set(wp_act)             # rows ACT_T..ACT_T_PAD stay 0
    w32 = w32.at[O_B1].set(b1[0])
    w32 = w32.at[O_B2].set(b2[0])
    w32 = w32.at[O_BP].set(bp[0])
    for l in range(N_LAYERS):
        mb = O_LMAT + l * LMAT_STRIDE
        vb = O_LVEC + l * LVEC_STRIDE
        w32 = w32.at[mb:mb + HIDDEN].set(w_vo[l])
        w32 = w32.at[mb + HIDDEN:mb + HIDDEN + FF].set(f2w[l])
        w32 = w32.at[vb + 0].set(b_vo[l, 0])
        w32 = w32.at[vb + 1].set(l1g[l, 0])
        w32 = w32.at[vb + 2].set(l1b[l, 0])
        w32 = w32.at[vb + 3].set(f2b[l, 0])
        w32 = w32.at[vb + 4].set(l2g[l, 0])
        w32 = w32.at[vb + 5].set(l2b[l, 0])

    w128 = jnp.zeros((W128_ROWS, OUT_PAD), jnp.float32)
    for l in range(N_LAYERS):
        w128 = w128.at[O_FF1W + l * HIDDEN:O_FF1W + (l + 1) * HIDDEN].set(f1w[l])
        w128 = w128.at[O_FF1B + l].set(f1b[l, 0])
    w128 = w128.at[O_OUTW:O_OUTW + HIDDEN, :AH].set(ow_f)
    w128 = w128.at[O_OUTB, :AH].set(ob_f[0])

    # MXU operands in bf16; kernel keeps elementwise / LN / GELU math in f32.
    return w32.astype(jnp.bfloat16), w128.astype(jnp.bfloat16)


# -------------------------------- tiling / VMEM --------------------------------
def _device_kind():
    try:
        return jax.devices()[0].device_kind.lower()
    except Exception:
        return ""


def _default_tb(b):
    dk = _device_kind()
    is_v7 = "v7" in dk
    cap = 2048 if (is_v7 or "v6" in dk) else 1024     # scoped-VMEM-safe tile per generation
    split_at = 256 if is_v7 else 2048                 # v7x: 2 TensorCores want >=2 grid tiles
    if b < split_at and b <= cap:
        return b
    for tiles in range(2, b // 8 + 1):
        if b % tiles == 0:
            tb = b // tiles
            if tb <= cap and tb % 8 == 0:
                return tb
    return b


def _vmem_limit_bytes(tb):
    row = 128 * 4                                     # <=128-lane f32 row pads to 128 lanes
    io = 2 * 3 * tb * row                             # obs/act_t/out, double-buffered
    wts = 2 * (W32_ROWS + W128_ROWS) * 128 * 2        # bf16 slabs, double-buffered
    inter = 16 * tb * row                             # generous live-intermediate bound
    est = io + wts + inter + (4 << 20)
    return int(min(max(est, 16 << 20), 64 << 20))


# -------------------------------- wrapper --------------------------------------
def diffusion_policy_forward(obs, noisy_action_seq, timestep, params, *, tb=None):
    # TODO(synk): a real denoising loop should fuse all diffusion steps into one
    # pallas_call (weights stay VMEM-resident across grid steps); out of scope here.
    b = obs.shape[0]
    tb = _default_tb(b) if tb is None else tb
    assert b % tb == 0
    grid = (b // tb,)

    # fold the 1-lane timestep into the action tensor host-side (one less DMA stream)
    # and zero-pad to the slab's sublane-aligned contraction width
    act_t = jnp.concatenate(
        [noisy_action_seq, timestep.astype(jnp.float32),
         jnp.zeros((b, ACT_T_PAD - ACT_T), jnp.float32)], axis=-1)

    w32, w128 = _pack_kernel_params(params)

    in_specs = [
        pl.BlockSpec((tb, OBS_DIM), lambda i: (i, 0)),
        pl.BlockSpec((tb, ACT_T_PAD), lambda i: (i, 0)),
        pl.BlockSpec((W32_ROWS, HIDDEN), lambda i: (0, 0)),
        pl.BlockSpec((W128_ROWS, OUT_PAD), lambda i: (0, 0)),
    ]
    out_spec = pl.BlockSpec((tb, OUT_PAD), lambda i: (i, 0))

    out_padded = pl.pallas_call(
        diffusion_policy_kernel,
        out_shape=jax.ShapeDtypeStruct((b, OUT_PAD), jnp.float32),
        grid_spec=pltpu.PrefetchScalarGridSpec(
            num_scalar_prefetch=0,
            grid=grid,
            in_specs=in_specs,
            out_specs=out_spec,
        ),
        compiler_params=pltpu.CompilerParams(
            dimension_semantics=("parallel",),
            vmem_limit_bytes=_vmem_limit_bytes(tb)),
    )(obs, act_t, w32, w128)

    return out_padded[:, :AH]


# --------------------------- deterministic params ------------------------------
def init_params(key):
    def dense(k, fan_in, fan_out):
        k1, k2 = jax.random.split(k)
        bound = 1.0 / float(fan_in) ** 0.5
        w = jax.random.uniform(k1, (fan_in, fan_out), jnp.float32, -bound, bound)
        b = jax.random.uniform(k2, (1, fan_out), jnp.float32, -bound, bound)
        return w, b

    keys = jax.random.split(key, 4 + N_LAYERS)
    w1, b1 = dense(keys[0], OBS_DIM, HIDDEN)
    w2, b2 = dense(keys[1], HIDDEN, HIDDEN)
    wp, bp = dense(keys[2], IN_DIM, HIDDEN)

    qkv_w, qkv_b, ao_w, ao_b = [], [], [], []
    ln1_g, ln1_b, ff1_w, ff1_b = [], [], [], []
    ff2_w, ff2_b, ln2_g, ln2_b = [], [], [], []
    for l in range(N_LAYERS):
        lk = jax.random.split(keys[3 + l], 4)
        w, bb = dense(lk[0], HIDDEN, 3 * HIDDEN); qkv_w.append(w); qkv_b.append(bb)
        w, bb = dense(lk[1], HIDDEN, HIDDEN);     ao_w.append(w);  ao_b.append(bb)
        w, bb = dense(lk[2], HIDDEN, FF);         ff1_w.append(w); ff1_b.append(bb)
        w, bb = dense(lk[3], FF, HIDDEN);         ff2_w.append(w); ff2_b.append(bb)
        ln1_g.append(jnp.ones((1, HIDDEN), jnp.float32))
        ln1_b.append(jnp.zeros((1, HIDDEN), jnp.float32))
        ln2_g.append(jnp.ones((1, HIDDEN), jnp.float32))
        ln2_b.append(jnp.zeros((1, HIDDEN), jnp.float32))

    ow, ob = dense(keys[3 + N_LAYERS], HIDDEN, AH)

    stack = lambda xs: jnp.stack(xs, axis=0)
    return (w1, b1, w2, b2, wp, bp,
            stack(qkv_w), stack(qkv_b), stack(ao_w), stack(ao_b),
            stack(ln1_g), stack(ln1_b),
            stack(ff1_w), stack(ff1_b), stack(ff2_w), stack(ff2_b),
            stack(ln2_g), stack(ln2_b),
            ow, ob)


# ------------------------------ pure-JAX reference -----------------------------
def reference_forward(obs, act, t, params):
    (w1, b1, w2, b2, wp, bp,
     qkv_w, qkv_b, ao_w, ao_b,
     l1g, l1b, f1w, f1b, f2w, f2b, l2g, l2b,
     ow, ob) = params

    gelu = lambda x: 0.5 * x * (1.0 + jax.lax.erf(x / jnp.sqrt(2.0)))

    def ln(x, g, bb):
        mu = x.mean(-1, keepdims=True)
        var = ((x - mu) ** 2).mean(-1, keepdims=True)
        return (x - mu) / jnp.sqrt(var + 1e-5) * g + bb

    h = gelu(obs @ w1 + b1)
    of = gelu(h @ w2 + b2)
    x = jnp.concatenate([of, act, t], axis=-1) @ wp + bp
    for l in range(N_LAYERS):
        # seq_len==1 => softmax over one key is 1 => attention == out_proj(V)
        v = (x @ qkv_w[l] + qkv_b[l])[:, 2 * HIDDEN:]
        attn = v @ ao_w[l] + ao_b[l]
        x = ln(x + attn, l1g[l], l1b[l])
        ff = gelu(x @ f1w[l] + f1b[l]) @ f2w[l] + f2b[l]
        x = ln(x + ff, l2g[l], l2b[l])
    return x @ ow + ob


# ----------------------------------- main --------------------------------------
if __name__ == "__main__":
    key = jax.random.PRNGKey(0)
    k_obs, k_act, k_t, k_par = jax.random.split(key, 4)

    obs = jax.random.normal(k_obs, (BATCH, OBS_DIM), jnp.float32)
    noisy_action_seq = jax.random.normal(k_act, (BATCH, AH), jnp.float32)
    timestep = jax.random.randint(k_t, (BATCH, 1), 0, 100).astype(jnp.float32)

    params = init_params(k_par)

    out = diffusion_policy_forward(obs, noisy_action_seq, timestep, params)
    out = jax.block_until_ready(out)

    ref = reference_forward(obs, noisy_action_seq, timestep, params)
    assert out.shape == (BATCH, AH)
    # bf16 MXU operands (f32 accumulation) vs. a pure-f32 reference => 2e-2 tolerance
    assert jnp.allclose(out, ref, rtol=2e-2, atol=2e-2), \
        f"max abs err = {jnp.max(jnp.abs(out - ref))}"

    print("KERNEL_OK")
</pallas_src>

<mosaic_0001>
module attributes {stable_mosaic.version = 11 : i64} {
  func.func @diffusion_policy_kernel(%arg0: i32, %arg1: memref<8x16xf32, #tpu.memory_space<vmem>>, %arg2: memref<8x24xf32, #tpu.memory_space<vmem>>, %arg3: memref<440x32xbf16, #tpu.memory_space<vmem>>, %arg4: memref<104x128xbf16, #tpu.memory_space<vmem>>, %arg5: memref<8x128xf32, #tpu.memory_space<vmem>>) attributes {dimension_semantics = [#tpu.dimension_semantics<parallel>], iteration_bounds = array<i64: 1>, scalar_prefetch = 0 : i64, scratch_operands = 0 : i64, tpu.core_type = #tpu.core_type<tc>, window_params = [{transform_indices = @transform_0, window_bounds = array<i64: 8, 16>}, {transform_indices = @transform_1, window_bounds = array<i64: 8, 24>}, {pipeline_mode = #tpu.pipeline_mode<synchronous>, transform_indices = @transform_2, window_bounds = array<i64: 440, 32>}, {pipeline_mode = #tpu.pipeline_mode<synchronous>, transform_indices = @transform_3, window_bounds = array<i64: 104, 128>}, {transform_indices = @transform_4, window_bounds = array<i64: 8, 128>}]} {
    %c0 = arith.constant 0 : index
    %c0_0 = arith.constant 0 : index
    %0 = vector.load %arg1[%c0, %c0_0] : memref<8x16xf32, #tpu.memory_space<vmem>>, vector<8x16xf32>
    %c0_1 = arith.constant 0 : index
    %c0_2 = arith.constant 0 : index
    %1 = vector.load %arg3[%c0_1, %c0_2] : memref<440x32xbf16, #tpu.memory_space<vmem>>, vector<16x32xbf16>
    %2 = arith.truncf %0 : vector<8x16xf32> to vector<8x16xbf16>
    %cst = arith.constant dense<0.000000e+00> : vector<8x32xf32>
    %3 = tpu.matmul %2, %1, %cst {dimension_numbers = #tpu.dot_dimension_numbers<[1], [0], [0], [1], [0, 0, 1, 1], [], []>} : vector<8x16xbf16>, vector<16x32xbf16>, vector<8x32xf32> -> vector<8x32xf32>
    %c424 = arith.constant 424 : index
    %c0_3 = arith.constant 0 : index
    %4 = vector.load %arg3[%c424, %c0_3] : memref<440x32xbf16, #tpu.memory_space<vmem>>, vector<1x32xbf16>
    %5 = arith.extf %4 : vector<1x32xbf16> to vector<1x32xf32>
    %6 = vector.broadcast %5 : vector<1x32xf32> to vector<8x32xf32>
    %7 = arith.addf %3, %6 : vector<8x32xf32>
    %cst_4 = arith.constant 5.000000e-01 : f32
    %8 = vector.broadcast %cst_4 : f32 to vector<8x32xf32>
    %9 = arith.mulf %8, %7 : vector<8x32xf32>
    %cst_5 = arith.constant 0.707106769 : f32
    %10 = vector.broadcast %cst_5 : f32 to vector<8x32xf32>
    %11 = arith.mulf %7, %10 : vector<8x32xf32>
    %12 = math.erf %11 : vector<8x32xf32>
    %cst_6 = arith.constant 1.000000e+00 : f32
    %13 = vector.broadcast %cst_6 : f32 to vector<8x32xf32>
    %14 = arith.addf %13, %12 : vector<8x32xf32>
    %15 = arith.mulf %9, %14 : vector<8x32xf32>
    %c16 = arith.constant 16 : index
    %c0_7 = arith.constant 0 : index
    %16 = vector.load %arg3[%c16, %c0_7] : memref<440x32xbf16, #tpu.memory_space<vmem>>, vector<32x32xbf16>
    %17 = arith.truncf %15 : vector<8x32xf32> to vector<8x32xbf16>
    %cst_8 = arith.constant dense<0.000000e+00> : vector<8x32xf32>
    %18 = tpu.matmul %17, %16, %cst_8 {dimension_numbers = #tpu.dot_dimension_numbers<[1], [0], [0], [1], [0, 0, 1, 1], [], []>} : vector<8x32xbf16>, vector<32x32xbf16>, vector<8x32xf32> -> vector<8x32xf32>
    %c425 = arith.constant 425 : index
    %c0_9 = arith.constant 0 : index
    %19 = vector.load %arg3[%c425, %c0_9] : memref<440x32xbf16, #tpu.memory_space<vmem>>, vector<1x32xbf16>
    %20 = arith.extf %19 : vector<1x32xbf16> to vector<1x32xf32>
    %21 = vector.broadcast %20 : vector<1x32xf32> to vector<8x32xf32>
    %22 = arith.addf %18, %21 : vector<8x32xf32>
    %cst_10 = arith.constant 5.000000e-01 : f32
    %23 = vector.broadcast %cst_10 : f32 to vector<8x32xf32>
    %24 = arith.mulf %23, %22 : vector<8x32xf32>
    %cst_11 = arith.constant 0.707106769 : f32
    %25 = vector.broadcast %cst_11 : f32 to vector<8x32xf32>
    %26 = arith.mulf %22, %25 : vector<8x32xf32>
    %27 = math.erf %26 : vector<8x32xf32>
    %cst_12 = arith.constant 1.000000e+00 : f32
    %28 = vector.broadcast %cst_12 : f32 to vector<8x32xf32>
    %29 = arith.addf %28, %27 : vector<8x32xf32>
    %30 = arith.mulf %24, %29 : vector<8x32xf32>
    %c48 = arith.constant 48 : index
    %c0_13 = arith.constant 0 : index
    %31 = vector.load %arg3[%c48, %c0_13] : memref<440x32xbf16, #tpu.memory_space<vmem>>, vector<32x32xbf16>
    %32 = arith.truncf %30 : vector<8x32xf32> to vector<8x32xbf16>
    %cst_14 = arith.constant dense<0.000000e+00> : vector<8x32xf32>
    %33 = tpu.matmul %32, %31, %cst_14 {dimension_numbers = #tpu.dot_dimension_numbers<[1], [0], [0], [1], [0, 0, 1, 1], [], []>} : vector<8x32xbf16>, vector<32x32xbf16>, vector<8x32xf32> -> vector<8x32xf32>
    %c0_15 = arith.constant 0 : index
    %c0_16 = arith.constant 0 : index
    %34 = vector.load %arg2[%c0_15, %c0_16] : memref<8x24xf32, #tpu.memory_space<vmem>>, vector<8x24xf32>
    %c80 = arith.constant 80 : index
    %c0_17 = arith.constant 0 : index
    %35 = vector.load %arg3[%c80, %c0_17] : memref<440x32xbf16, #tpu.memory_space<vmem>>, vector<24x32xbf16>
    %36 = arith.truncf %34 : vector<8x24xf32> to vector<8x24xbf16>
    %cst_18 = arith.constant dense<0.000000e+00> : vector<8x32xf32>
    %37 = tpu.matmul %36, %35, %cst_18 {dimension_numbers = #tpu.dot_dimension_numbers<[1], [0], [0], [1], [0, 0, 1, 1], [], []>} : vector<8x24xbf16>, vector<24x32xbf16>, vector<8x32xf32> -> vector<8x32xf32>
    %38 = arith.addf %33, %37 : vector<8x32xf32>
    %c426 = arith.constant 426 : index
    %c0_19 = arith.constant 0 : index
    %39 = vector.load %arg3[%c426, %c0_19] : memref<440x32xbf16, #tpu.memory_space<vmem>>, vector<1x32xbf16>
    %40 = arith.extf %39 : vector<1x32xbf16> to vector<1x32xf32>
    %41 = vector.broadcast %40 : vector<1x32xf32> to vector<8x32xf32>
    %42 = arith.addf %38, %41 : vector<8x32xf32>
    %c104 = arith.constant 104 : index
    %c0_20 = arith.constant 0 : index
    %43 = vector.load %arg3[%c104, %c0_20] : memref<440x32xbf16, #tpu.memory_space<vmem>>, vector<32x32xbf16>
    %44 = arith.truncf %42 : vector<8x32xf32> to vector<8x32xbf16>
    %cst_21 = arith.constant dense<0.000000e+00> : vector<8x32xf32>
    %45 = tpu.matmul %44, %43, %cst_21 {dimension_numbers = #tpu.dot_dimension_numbers<[1], [0], [0], [1], [0, 0, 1, 1], [], []>} : vector<8x32xbf16>, vector<32x32xbf16>, vector<8x32xf32> -> vector<8x32xf32>
    %c427 = arith.constant 427 : index
    %c0_22 = arith.constant 0 : index
    %46 = vector.load %arg3[%c427, %c0_22] : memref<440x32xbf16, #tpu.memory_space<vmem>>, vector<1x32xbf16>
    %47 = arith.extf %46 : vector<1x32xbf16> to vector<1x32xf32>
    %48 = vector.broadcast %47 : vector<1x32xf32> to vector<8x32xf32>
    %49 = arith.addf %45, %48 : vector<8x32xf32>
    %c428 = arith.constant 428 : index
    %c0_23 = arith.constant 0 : index
    %50 = vector.load %arg3[%c428, %c0_23] : memref<440x32xbf16, #tpu.memory_space<vmem>>, vector<1x32xbf16>
    %51 = arith.extf %50 : vector<1x32xbf16> to vector<1x32xf32>
    %c429 = arith.constant 429 : index
    %c0_24 = arith.constant 0 : index
    %52 = vector.load %arg3[%c429, %c0_24] : memref<440x32xbf16, #tpu.memory_space<vmem>>, vector<1x32xbf16>
    %53 = arith.extf %52 : vector<1x32xbf16> to vector<1x32xf32>
    %54 = arith.addf %42, %49 : vector<8x32xf32>
    %cst_25 = arith.constant dense<0.000000e+00> : vector<8xf32>
    %55 = vector.multi_reduction <add>, %54, %cst_25 [1] : vector<8x32xf32> to vector<8xf32>
    %56 = vector.shape_cast %55 : vector<8xf32> to vector<8x1xf32>
    %cst_26 = arith.constant 3.200000e+01 : f32
    %57 = vector.broadcast %cst_26 : f32 to vector<8x1xf32>
    %58 = arith.divf %56, %57 : vector<8x1xf32>
    %59 = vector.broadcast %58 : vector<8x1xf32> to vector<8x32xf32>
    %60 = arith.subf %54, %59 : vector<8x32xf32>
    %61 = arith.mulf %60, %60 : vector<8x32xf32>
    %cst_27 = arith.constant dense<0.000000e+00> : vector<8xf32>
    %62 = vector.multi_reduction <add>, %61, %cst_27 [1] : vector<8x32xf32> to vector<8xf32>
    %63 = vector.shape_cast %62 : vector<8xf32> to vector<8x1xf32>
    %cst_28 = arith.constant 3.200000e+01 : f32
    %64 = vector.broadcast %cst_28 : f32 to vector<8x1xf32>
    %65 = arith.divf %63, %64 : vector<8x1xf32>
    %cst_29 = arith.constant 9.99999974E-6 : f32
    %66 = vector.broadcast %cst_29 : f32 to vector<8x1xf32>
    %67 = arith.addf %65, %66 : vector<8x1xf32>
    %68 = math.rsqrt %67 : vector<8x1xf32>
    %69 = vector.broadcast %68 : vector<8x1xf32> to vector<8x32xf32>
    %70 = arith.mulf %60, %69 : vector<8x32xf32>
    %71 = vector.broadcast %51 : vector<1x32xf32> to vector<8x32xf32>
    %72 = arith.mulf %70, %71 : vector<8x32xf32>
    %73 = vector.broadcast %53 : vector<1x32xf32> to vector<8x32xf32>
    %74 = arith.addf %72, %73 : vector<8x32xf32>
    %c0_30 = arith.constant 0 : index
    %c0_31 = arith.constant 0 : index
    %75 = vector.load %arg4[%c0_30, %c0_31] : memref<104x128xbf16, #tpu.memory_space<vmem>>, vector<32x128xbf16>
    %76 = arith.truncf %74 : vector<8x32xf32> to vector<8x32xbf16>
    %cst_32 = arith.constant dense<0.000000e+00> : vector<8x128xf32>
    %77 = tpu.matmul %76, %75, %cst_32 {dimension_numbers = #tpu.dot_dimension_numbers<[1], [0], [0], [1], [0, 0, 1, 1], [], []>} : vector<8x32xbf16>, vector<32x128xbf16>, vector<8x128xf32> -> vector<8x128xf32>
    %c96 = arith.constant 96 : index
    %c0_33 = arith.constant 0 : index
    %78 = vector.load %arg4[%c96, %c0_33] : memref<104x128xbf16, #tpu.memory_space<vmem>>, vector<1x128xbf16>
    %79 = arith.extf %78 : vector<1x128xbf16> to vector<1x128xf32>
    %80 = vector.broadcast %79 : vector<1x128xf32> to vector<8x128xf32>
    %81 = arith.addf %77, %80 : vector<8x128xf32>
    %cst_34 = arith.constant 5.000000e-01 : f32
    %82 = vector.broadcast %cst_34 : f32 to vector<8x128xf32>
    %83 = arith.mulf %82, %81 : vector<8x128xf32>
    %cst_35 = arith.constant 0.707106769 : f32
    %84 = vector.broadcast %cst_35 : f32 to vector<8x128xf32>
    %85 = arith.mulf %81, %84 : vector<8x128xf32>
    %86 = math.erf %85 : vector<8x128xf32>
    %cst_36 = arith.constant 1.000000e+00 : f32
    %87 = vector.broadcast %cst_36 : f32 to vector<8x128xf32>
    %88 = arith.addf %87, %86 : vector<8x128xf32>
    %89 = arith.mulf %83, %88 : vector<8x128xf32>
    %c136 = arith.constant 136 : index
    %c0_37 = arith.constant 0 : index
    %90 = vector.load %arg3[%c136, %c0_37] : memref<440x32xbf16, #tpu.memory_space<vmem>>, vector<128x32xbf16>
    %91 = arith.truncf %89 : vector<8x128xf32> to vector<8x128xbf16>
    %cst_38 = arith.constant dense<0.000000e+00> : vector<8x32xf32>
    %92 = tpu.matmul %91, %90, %cst_38 {dimension_numbers = #tpu.dot_dimension_numbers<[1], [0], [0], [1], [0, 0, 1, 1], [], []>} : vector<8x128xbf16>, vector<128x32xbf16>, vector<8x32xf32> -> vector<8x32xf32>
    %c430 = arith.constant 430 : index
    %c0_39 = arith.constant 0 : index
    %93 = vector.load %arg3[%c430, %c0_39] : memref<440x32xbf16, #tpu.memory_space<vmem>>, vector<1x32xbf16>
    %94 = arith.extf %93 : vector<1x32xbf16> to vector<1x32xf32>
    %95 = vector.broadcast %94 : vector<1x32xf32> to vector<8x32xf32>
    %96 = arith.addf %92, %95 : vector<8x32xf32>
    %c431 = arith.constant 431 : index
    %c0_40 = arith.constant 0 : index
    %97 = vector.load %arg3[%c431, %c0_40] : memref<440x32xbf16, #tpu.memory_space<vmem>>, vector<1x32xbf16>
    %98 = arith.extf %97 : vector<1x32xbf16> to vector<1x32xf32>
    %c432 = arith.constant 432 : index
    %c0_41 = arith.constant 0 : index
    %99 = vector.load %arg3[%c432, %c0_41] : memref<440x32xbf16, #tpu.memory_space<vmem>>, vector<1x32xbf16>
    %100 = arith.extf %99 : vector<1x32xbf16> to vector<1x32xf32>
    %101 = arith.addf %74, %96 : vector<8x32xf32>
    %cst_42 = arith.constant dense<0.000000e+00> : vector<8xf32>
    %102 = vector.multi_reduction <add>, %101, %cst_42 [1] : vector<8x32xf32> to vector<8xf32>
    %103 = vector.shape_cast %102 : vector<8xf32> to vector<8x1xf32>
    %cst_43 = arith.constant 3.200000e+01 : f32
    %104 = vector.broadcast %cst_43 : f32 to vector<8x1xf32>
    %105 = arith.divf %103, %104 : vector<8x1xf32>
    %106 = vector.broadcast %105 : vector<8x1xf32> to vector<8x32xf32>
    %107 = arith.subf %101, %106 : vector<8x32xf32>
    %108 = arith.mulf %107, %107 : vector<8x32xf32>
    %cst_44 = arith.constant dense<0.000000e+00> : vector<8xf32>
    %109 = vector.multi_reduction <add>, %108, %cst_44 [1] : vector<8x32xf32> to vector<8xf32>
    %110 = vector.shape_cast %109 : vector<8xf32> to vector<8x1xf32>
    %cst_45 = arith.constant 3.200000e+01 : f32
    %111 = vector.broadcast %cst_45 : f32 to vector<8x1xf32>
    %112 = arith.divf %110, %111 : vector<8x1xf32>
    %cst_46 = arith.constant 9.99999974E-6 : f32
    %113 = vector.broadcast %cst_46 : f32 to vector<8x1xf32>
    %114 = arith.addf %112, %113 : vector<8x1xf32>
    %115 = math.rsqrt %114 : vector<8x1xf32>
    %116 = vector.broadcast %115 : vector<8x1xf32> to vector<8x32xf32>
    %117 = arith.mulf %107, %116 : vector<8x32xf32>
    %118 = vector.broadcast %98 : vector<1x32xf32> to vector<8x32xf32>
    %119 = arith.mulf %117, %118 : vector<8x32xf32>
    %120 = vector.broadcast %100 : vector<1x32xf32> to vector<8x32xf32>
    %121 = arith.addf %119, %120 : vector<8x32xf32>
    %c264 = arith.constant 264 : index
    %c0_47 = arith.constant 0 : index
    %122 = vector.load %arg3[%c264, %c0_47] : memref<440x32xbf16, #tpu.memory_space<vmem>>, vector<32x32xbf16>
    %123 = arith.truncf %121 : vector<8x32xf32> to vector<8x32xbf16>
    %cst_48 = arith.constant dense<0.000000e+00> : vector<8x32xf32>
    %124 = tpu.matmul %123, %122, %cst_48 {dimension_numbers = #tpu.dot_dimension_numbers<[1], [0], [0], [1], [0, 0, 1, 1], [], []>} : vector<8x32xbf16>, vector<32x32xbf16>, vector<8x32xf32> -> vector<8x32xf32>
    %c433 = arith.constant 433 : index
    %c0_49 = arith.constant 0 : index
    %125 = vector.load %arg3[%c433, %c0_49] : memref<440x32xbf16, #tpu.memory_space<vmem>>, vector<1x32xbf16>
    %126 = arith.extf %125 : vector<1x32xbf16> to vector<1x32xf32>
    %127 = vector.broadcast %126 : vector<1x32xf32> to vector<8x32xf32>
    %128 = arith.addf %124, %127 : vector<8x32xf32>
    %c434 = arith.constant 434 : index
    %c0_50 = arith.constant 0 : index
    %129 = vector.load %arg3[%c434, %c0_50] : memref<440x32xbf16, #tpu.memory_space<vmem>>, vector<1x32xbf16>
    %130 = arith.extf %129 : vector<1x32xbf16> to vector<1x32xf32>
    %c435 = arith.constant 435 : index
    %c0_51 = arith.constant 0 : index
    %131 = vector.load %arg3[%c435, %c0_51] : memref<440x32xbf16, #tpu.memory_space<vmem>>, vector<1x32xbf16>
    %132 = arith.extf %131 : vector<1x32xbf16> to vector<1x32xf32>
    %133 = arith.addf %121, %128 : vector<8x32xf32>
    %cst_52 = arith.constant dense<0.000000e+00> : vector<8xf32>
    %134 = vector.multi_reduction <add>, %133, %cst_52 [1] : vector<8x32xf32> to vector<8xf32>
    %135 = vector.shape_cast %134 : vector<8xf32> to vector<8x1xf32>
    %cst_53 = arith.constant 3.200000e+01 : f32
    %136 = vector.broadcast %cst_53 : f32 to vector<8x1xf32>
    %137 = arith.divf %135, %136 : vector<8x1xf32>
    %138 = vector.broadcast %137 : vector<8x1xf32> to vector<8x32xf32>
    %139 = arith.subf %133, %138 : vector<8x32xf32>
    %140 = arith.mulf %139, %139 : vector<8x32xf32>
    %cst_54 = arith.constant dense<0.000000e+00> : vector<8xf32>
    %141 = vector.multi_reduction <add>, %140, %cst_54 [1] : vector<8x32xf32> to vector<8xf32>
    %142 = vector.shape_cast %141 : vector<8xf32> to vector<8x1xf32>
    %cst_55 = arith.constant 3.200000e+01 : f32
    %143 = vector.broadcast %cst_55 : f32 to vector<8x1xf32>
    %144 = arith.divf %142, %143 : vector<8x1xf32>
    %cst_56 = arith.constant 9.99999974E-6 : f32
    %145 = vector.broadcast %cst_56 : f32 to vector<8x1xf32>
    %146 = arith.addf %144, %145 : vector<8x1xf32>
    %147 = math.rsqrt %146 : vector<8x1xf32>
    %148 = vector.broadcast %147 : vector<8x1xf32> to vector<8x32xf32>
    %149 = arith.mulf %139, %148 : vector<8x32xf32>
    %150 = vector.broadcast %130 : vector<1x32xf32> to vector<8x32xf32>
    %151 = arith.mulf %149, %150 : vector<8x32xf32>
    %152 = vector.broadcast %132 : vector<1x32xf32> to vector<8x32xf32>
    %153 = arith.addf %151, %152 : vector<8x32xf32>
    %c32 = arith.constant 32 : index
    %c0_57 = arith.constant 0 : index
    %154 = vector.load %arg4[%c32, %c0_57] : memref<104x128xbf16, #tpu.memory_space<vmem>>, vector<32x128xbf16>
    %155 = arith.truncf %153 : vector<8x32xf32> to vector<8x32xbf16>
    %cst_58 = arith.constant dense<0.000000e+00> : vector<8x128xf32>
    %156 = tpu.matmul %155, %154, %cst_58 {dimension_numbers = #tpu.dot_dimension_numbers<[1], [0], [0], [1], [0, 0, 1, 1], [], []>} : vector<8x32xbf16>, vector<32x128xbf16>, vector<8x128xf32> -> vector<8x128xf32>
    %c97 = arith.constant 97 : index
    %c0_59 = arith.constant 0 : index
    %157 = vector.load %arg4[%c97, %c0_59] : memref<104x128xbf16, #tpu.memory_space<vmem>>, vector<1x128xbf16>
    %158 = arith.extf %157 : vector<1x128xbf16> to vector<1x128xf32>
    %159 = vector.broadcast %158 : vector<1x128xf32> to vector<8x128xf32>
    %160 = arith.addf %156, %159 : vector<8x128xf32>
    %cst_60 = arith.constant 5.000000e-01 : f32
    %161 = vector.broadcast %cst_60 : f32 to vector<8x128xf32>
    %162 = arith.mulf %161, %160 : vector<8x128xf32>
    %cst_61 = arith.constant 0.707106769 : f32
    %163 = vector.broadcast %cst_61 : f32 to vector<8x128xf32>
    %164 = arith.mulf %160, %163 : vector<8x128xf32>
    %165 = math.erf %164 : vector<8x128xf32>
    %cst_62 = arith.constant 1.000000e+00 : f32
    %166 = vector.broadcast %cst_62 : f32 to vector<8x128xf32>
    %167 = arith.addf %166, %165 : vector<8x128xf32>
    %168 = arith.mulf %162, %167 : vector<8x128xf32>
    %c296 = arith.constant 296 : index
    %c0_63 = arith.constant 0 : index
    %169 = vector.load %arg3[%c296, %c0_63] : memref<440x32xbf16, #tpu.memory_space<vmem>>, vector<128x32xbf16>
    %170 = arith.truncf %168 : vector<8x128xf32> to vector<8x128xbf16>
    %cst_64 = arith.constant dense<0.000000e+00> : vector<8x32xf32>
    %171 = tpu.matmul %170, %169, %cst_64 {dimension_numbers = #tpu.dot_dimension_numbers<[1], [0], [0], [1], [0, 0, 1, 1], [], []>} : vector<8x128xbf16>, vector<128x32xbf16>, vector<8x32xf32> -> vector<8x32xf32>
    %c436 = arith.constant 436 : index
    %c0_65 = arith.constant 0 : index
    %172 = vector.load %arg3[%c436, %c0_65] : memref<440x32xbf16, #tpu.memory_space<vmem>>, vector<1x32xbf16>
    %173 = arith.extf %172 : vector<1x32xbf16> to vector<1x32xf32>
    %174 = vector.broadcast %173 : vector<1x32xf32> to vector<8x32xf32>
    %175 = arith.addf %171, %174 : vector<8x32xf32>
    %176 = arith.addf %153, %175 : vector<8x32xf32>
    %cst_66 = arith.constant dense<0.000000e+00> : vector<8xf32>
    %177 = vector.multi_reduction <add>, %176, %cst_66 [1] : vector<8x32xf32> to vector<8xf32>
    %178 = vector.shape_cast %177 : vector<8xf32> to vector<8x1xf32>
    %cst_67 = arith.constant 3.200000e+01 : f32
    %179 = vector.broadcast %cst_67 : f32 to vector<8x1xf32>
    %180 = arith.divf %178, %179 : vector<8x1xf32>
    %181 = vector.broadcast %180 : vector<8x1xf32> to vector<8x32xf32>
    %182 = arith.subf %176, %181 : vector<8x32xf32>
    %183 = arith.mulf %182, %182 : vector<8x32xf32>
    %cst_68 = arith.constant dense<0.000000e+00> : vector<8xf32>
    %184 = vector.multi_reduction <add>, %183, %cst_68 [1] : vector<8x32xf32> to vector<8xf32>
    %185 = vector.shape_cast %184 : vector<8xf32> to vector<8x1xf32>
    %cst_69 = arith.constant 3.200000e+01 : f32
    %186 = vector.broadcast %cst_69 : f32 to vector<8x1xf32>
    %187 = arith.divf %185, %186 : vector<8x1xf32>
    %cst_70 = arith.constant 9.99999974E-6 : f32
    %188 = vector.broadcast %cst_70 : f32 to vector<8x1xf32>
    %189 = arith.addf %187, %188 : vector<8x1xf32>
    %190 = math.rsqrt %189 : vector<8x1xf32>
    %191 = vector.broadcast %190 : vector<8x1xf32> to vector<8x32xf32>
    %192 = arith.mulf %182, %191 : vector<8x32xf32>
    %c64 = arith.constant 64 : index
    %c0_71 = arith.constant 0 : index
    %193 = vector.load %arg4[%c64, %c0_71] : memref<104x128xbf16, #tpu.memory_space<vmem>>, vector<32x128xbf16>
    %194 = arith.truncf %192 : vector<8x32xf32> to vector<8x32xbf16>
    %cst_72 = arith.constant dense<0.000000e+00> : vector<8x128xf32>
    %195 = tpu.matmul %194, %193, %cst_72 {dimension_numbers = #tpu.dot_dimension_numbers<[1], [0], [0], [1], [0, 0, 1, 1], [], []>} : vector<8x32xbf16>, vector<32x128xbf16>, vector<8x128xf32> -> vector<8x128xf32>
    %c98 = arith.constant 98 : index
    %c0_73 = arith.constant 0 : index
    %196 = vector.load %arg4[%c98, %c0_73] : memref<104x128xbf16, #tpu.memory_space<vmem>>, vector<1x128xbf16>
    %197 = arith.extf %196 : vector<1x128xbf16> to vector<1x128xf32>
    %198 = vector.broadcast %197 : vector<1x128xf32> to vector<8x128xf32>
    %199 = arith.addf %195, %198 : vector<8x128xf32>
    %c0_74 = arith.constant 0 : index
    %c0_75 = arith.constant 0 : index
    %200 = vector.load %arg5[%c0_74, %c0_75] : memref<8x128xf32, #tpu.memory_space<vmem>>, vector<8x128xf32>
    tpu.vector_store %arg5[%c0_74, %c0_75], %199 {strides = array<i32>} : memref<8x128xf32, #tpu.memory_space<vmem>>, vector<8x128xf32>,
    return
  }
  func.func @transform_0(%arg0: i32) -> (i32, i32) {
    %c0_i32 = arith.constant 0 : i32
    %c0_i32_0 = arith.constant 0 : i32
    return %arg0, %c0_i32 : i32, i32
  }
  func.func @transform_1(%arg0: i32) -> (i32, i32) {
    %c0_i32 = arith.constant 0 : i32
    %c0_i32_0 = arith.constant 0 : i32
    return %arg0, %c0_i32 : i32, i32
  }
  func.func @transform_2(%arg0: i32) -> (i32, i32) {
    %c0_i32 = arith.constant 0 : i32
    %c0_i32_0 = arith.constant 0 : i32
    %c0_i32_1 = arith.constant 0 : i32
    return %c0_i32, %c0_i32_0 : i32, i32
  }
  func.func @transform_3(%arg0: i32) -> (i32, i32) {
    %c0_i32 = arith.constant 0 : i32
    %c0_i32_0 = arith.constant 0 : i32
    %c0_i32_1 = arith.constant 0 : i32
    return %c0_i32, %c0_i32_0 : i32, i32
  }
  func.func @transform_4(%arg0: i32) -> (i32, i32) {
    %c0_i32 = arith.constant 0 : i32
    %c0_i32_0 = arith.constant 0 : i32
    return %arg0, %c0_i32 : i32, i32
  }
}

</mosaic_0001>

<llo_original>
// kernel: tpu_custom_call.1
$region0: #{tpu_custom_call.1}
  #allocation0 [shape = 'u32[]', space=smem, size = 0x4, offset = 0x4, fixed_abs, tag = 'smem constant byte address 0x4 - core index']
  #allocation1 [shape = 'u32[144,128]{1,0:T(1,128)}', space=vmem, size = 0x12000, scoped, tag = 'internal scratch']
  %s0 = inlined_call_operand.vmem [shape: f32[8,16], index: 0, kind: input, shape index: {}]
  %s1 = inlined_call_operand.vmem [shape: f32[8,24], index: 1, kind: input, shape index: {}]
  %s2 = inlined_call_operand.vmem [shape: bf16[440,32], index: 2, kind: input, shape index: {}]
  %s3 = inlined_call_operand.vmem [shape: bf16[104,128], index: 3, kind: input, shape index: {}]
  %s4 = inlined_call_operand.hbm [shape: f32[8,128], index: 4, kind: output, shape index: {}]
  %s5 = sld [smem:[#allocation0]]
  $region26: #{tpu_custom_call.1} parent=0
    _
  %s7 = ssub.s32 1, %s5
  %s8 = scalar_select 0, %s7, %s5
  $region1: #{tpu_custom_call.1} parent=0
    #allocation2 [shape = 'u8[4096]{0}', space=vmem, size = 0x1000, scoped, tag = 'output window, operand 0, single buffered']
    #allocation3 [shape = 's32[1]{0}', space=sflag, size = 0x4, scoped, tag = 'scoped memory for tpu_custom_call.1']
    %9 = vsyncpa [#allocation3], 0
    // Predicated region
    $region2: #{tpu_custom_call.1} parent=1 // pred_check
      _
    $region3: #{tpu_custom_call.1} parent=1 // pred_check_branch
      %11 = sbr.rel (0) target = $region5
    $region4: #{tpu_custom_call.1} parent=1 // pred_region
      _
    $region5: #{tpu_custom_call.1} parent=1 // pred_fallthru
      _
    // Predicated region
    $region6: #{tpu_custom_call.1} parent=1 // pred_check
      _
    $region7: #{tpu_custom_call.1} parent=1 // pred_check_branch
      %13 = sbr.rel (0) target = $region9
    $region8: #{tpu_custom_call.1} parent=1 // pred_region
      _
    $region9: #{tpu_custom_call.1} parent=1 // pred_fallthru
      _
    // Predicated region
    $region10: #{tpu_custom_call.1} parent=1 // pred_check
      _
    $region11: #{tpu_custom_call.1} parent=1 // pred_check_branch
      %15 = sbr.rel (0) target = $region13
    $region12: #{tpu_custom_call.1} parent=1 // pred_region
      _
    $region13: #{tpu_custom_call.1} parent=1 // pred_fallthru
      _
    // Predicated region
    $region14: #{tpu_custom_call.1} parent=1 // pred_check
      _
    $region15: #{tpu_custom_call.1} parent=1 // pred_check_branch
      %17 = sbr.rel (0) target = $region17
    $region16: #{tpu_custom_call.1} parent=1 // pred_region
      _
    $region17: #{tpu_custom_call.1} parent=1 // pred_fallthru
      _
    %v19 = vld [vmem:[%s0] sm:$0xff]
    %v20 = vld [vmem:[%s2] sm:$0xf]
    %v21 = vld [vmem:[%s2 + $0x4] sm:$0xf]
    %v22 = vpack.c.bf16 %v19, %v19
    %v23 = vld [vmem:[%s2 + $0xd4] sm:$0x1]
    %v24 = vunpack.c.l.bf16 %v23
    %v25 = vlaneseq
    %v26 = vshrl.u32 %v25, 7
    %v27 = vsub.s32 0, %v26
    %v28 = vrot.slane %v24, %v27
    %v31 = vunpack.c.l.b16 %v20
    %v32 = vunpack.c.l.b16 %v21
    %v33 = vpack.c.b16 %v32, %v31
    %vm35 = vcmask 130048
    %v37 = vsel %vm35, %v22, 0
    %39 = vmatprep.subr.bf16.mxu0 0
    %40 = vmatpush1.bf16.msra.mxu0 %v33
    %41 = vmatprep.subr.bf16.mxu0 0
    %42 = vmatpush1.bf16.msra.mxu0 0
    %43 = vmatprep.subr.bf16.mxu0 0
    %44 = vmatpush1.bf16.msra.mxu0 0
    %45 = vmatprep.subr.bf16.mxu0 0
    %46 = vmatpush1.bf16.msra.mxu0 0
    %47 = vmatprep.subr.bf16.mxu0 0
    %48 = vmatpush1.bf16.msra.mxu0 0
    %49 = vmatprep.subr.bf16.mxu0 0
    %50 = vmatpush1.bf16.msra.mxu0 0
    %51 = vmatprep.subr.bf16.mxu0 0
    %52 = vmatpush1.bf16.msra.mxu0 0
    %53 = vmatprep.subr.bf16.mxu0 0
    %54 = vmatpush1.bf16.msra.mxu0 0
    %55 = vmatprep.subr.bf16.mxu0 0
    %56 = vmatpush1.bf16.msra.mxu0 0
    %57 = vmatprep.subr.bf16.mxu0 0
    %58 = vmatpush1.bf16.msra.mxu0 0
    %59 = vmatprep.subr.bf16.mxu0 0
    %60 = vmatpush1.bf16.msra.mxu0 0
    %61 = vmatprep.subr.bf16.mxu0 0
    %62 = vmatpush1.bf16.msra.mxu0 0
    %63 = vmatprep.subr.bf16.mxu0 0
    %64 = vmatpush1.bf16.msra.mxu0 0
    %65 = vmatprep.subr.bf16.mxu0 0
    %66 = vmatpush1.bf16.msra.mxu0 0
    %67 = vmatprep.subr.bf16.mxu0 0
    %68 = vmatpush1.bf16.msra.mxu0 0
    %69 = vmatprep.subr.bf16.mxu0 0
    %70 = vmatpush1.bf16.msra.mxu0 0
    %71 = vmatprep.mubr.bf16.mxu0 0
    %72 = vmatmul.mubr.bf16.gmra.mrb[0].mxu0 %v37
    %v73 = vpop.f32.mrb[0].mxu0
    %v74 = vadd.f32 %v28, %v73
    %v75 = vpop.f32.mrb[0].mxu0
    %v76 = vpop.f32.mrb[0].mxu0
    %v77 = vpop.f32.mrb[0].mxu0
    %78 = vdwg.mxu0
    %v79 = vmul.f32 %v74, 0.5
    %v80 = vmul.f32 %v74, 0.70710677
    %v81 = verf.f32.pop %v80
    %v82 = vadd.f32 %v81, 1.0
    %v83 = vmul.f32 %v79, %v82
    %v84 = vld [vmem:[%s2 + $0x8] sm:$0xf]
    %v85 = vld [vmem:[%s2 + $0xc] sm:$0xf]
    %v86 = vld [vmem:[%s2 + $0x10] sm:$0xf]
    %v87 = vld [vmem:[%s2 + $0x14] sm:$0xf]
    %v88 = vpack.c.bf16 %v83, %v83
    %v89 = vlaneseq
    %v90 = vshrl.u32 %v89, 7
    %v91 = vsub.s32 1, %v90
    %v92 = vrot.slane %v24, %v91
    %v97 = vunpack.c.l.b16 %v84
    %v98 = vunpack.c.l.b16 %v85
    %v99 = vunpack.c.l.b16 %v86
    %v100 = vunpack.c.l.b16 %v87
    %v101 = vpack.c.b16 %v98, %v97
    %v102 = vpack.c.b16 %v100, %v99
    %vm105 = vcmask 261120
    %v107 = vsel %vm105, %v88, 0
    %109 = vmatprep.subr.bf16.mxu0 0
    %110 = vmatpush1.bf16.msra.mxu0 %v101
    %111 = vmatprep.subr.bf16.mxu0 0
    %112 = vmatpush1.bf16.msra.mxu0 %v102
    %113 = vmatprep.subr.bf16.mxu0 0
    %114 = vmatpush1.bf16.msra.mxu0 0
    %115 = vmatprep.subr.bf16.mxu0 0
    %116 = vmatpush1.bf16.msra.mxu0 0
    %117 = vmatprep.subr.bf16.mxu0 0
    %118 = vmatpush1.bf16.msra.mxu0 0
    %119 = vmatprep.subr.bf16.mxu0 0
    %120 = vmatpush1.bf16.msra.mxu0 0
    %121 = vmatprep.subr.bf16.mxu0 0
    %122 = vmatpush1.bf16.msra.mxu0 0
    %123 = vmatprep.subr.bf16.mxu0 0
    %124 = vmatpush1.bf16.msra.mxu0 0
    %125 = vmatprep.subr.bf16.mxu0 0
    %126 = vmatpush1.bf16.msra.mxu0 0
    %127 = vmatprep.subr.bf16.mxu0 0
    %128 = vmatpush1.bf16.msra.mxu0 0
    %129 = vmatprep.subr.bf16.mxu0 0
    %130 = vmatpush1.bf16.msra.mxu0 0
    %131 = vmatprep.subr.bf16.mxu0 0
    %132 = vmatpush1.bf16.msra.mxu0 0
    %133 = vmatprep.subr.bf16.mxu0 0
    %134 = vmatpush1.bf16.msra.mxu0 0
    %135 = vmatprep.subr.bf16.mxu0 0
    %136 = vmatpush1.bf16.msra.mxu0 0
    %137 = vmatprep.subr.bf16.mxu0 0
    %138 = vmatpush1.bf16.msra.mxu0 0
    %139 = vmatprep.subr.bf16.mxu0 0
    %140 = vmatpush1.bf16.msra.mxu0 0
    %141 = vmatprep.mubr.bf16.mxu0 0
    %142 = vmatmul.mubr.bf16.gmra.mrb[0].mxu0 %v107
    %v143 = vpop.f32.mrb[0].mxu0
    %v144 = vadd.f32 %v92, %v143
    %v145 = vpop.f32.mrb[0].mxu0
    %v146 = vpop.f32.mrb[0].mxu0
    %v147 = vpop.f32.mrb[0].mxu0
    %148 = vdwg.mxu0
    %v149 = vmul.f32 %v144, 0.5
    %v150 = vmul.f32 %v144, 0.70710677
    %v151 = verf.f32.pop %v150
    %v152 = vadd.f32 %v151, 1.0
    %v153 = vmul.f32 %v149, %v152
    %v154 = vld [vmem:[%s2 + $0x18] sm:$0xf]
    %v155 = vld [vmem:[%s2 + $0x1c] sm:$0xf]
    %v156 = vld [vmem:[%s2 + $0x20] sm:$0xf]
    %v157 = vld [vmem:[%s2 + $0x24] sm:$0xf]
    %v158 = vpack.c.bf16 %v153, %v153
    %v159 = vld [vmem:[%s1] sm:$0xff]
    %v160 = vld [vmem:[%s2 + $0x28] sm:$0xf]
    %v161 = vld [vmem:[%s2 + $0x2c] sm:$0xf]
    %v162 = vld [vmem:[%s2 + $0x30] sm:$0xf]
    %v163 = vpack.c.bf16 %v159, %v159
    %v167 = vunpack.c.l.b16 %v160
    %v168 = vunpack.c.l.b16 %v161
    %v169 = vunpack.c.l.b16 %v162
    %v170 = vpack.c.b16 %v168, %v167
    %v171 = vpack.c.b16 %v169, %v169
    %vm173 = vcmask 195584
    %v175 = vsel %vm173, %v163, 0
    %vm177 = vcmask 1043456
    %v179 = vsel %vm177, %v171, 0
    %181 = vmatprep.subr.bf16.mxu0 0
    %182 = vmatpush1.bf16.msra.mxu0 %v170
    %183 = vmatprep.subr.bf16.mxu0 0
    %184 = vmatpush1.bf16.msra.mxu0 %v179
    %185 = vmatprep.subr.bf16.mxu0 0
    %186 = vmatpush1.bf16.msra.mxu0 0
    %187 = vmatprep.subr.bf16.mxu0 0
    %188 = vmatpush1.bf16.msra.mxu0 0
    %189 = vmatprep.subr.bf16.mxu0 0
    %190 = vmatpush1.bf16.msra.mxu0 0
    %191 = vmatprep.subr.bf16.mxu0 0
    %192 = vmatpush1.bf16.msra.mxu0 0
    %193 = vmatprep.subr.bf16.mxu0 0
    %194 = vmatpush1.bf16.msra.mxu0 0
    %195 = vmatprep.subr.bf16.mxu0 0
    %196 = vmatpush1.bf16.msra.mxu0 0
    %197 = vmatprep.subr.bf16.mxu0 0
    %198 = vmatpush1.bf16.msra.mxu0 0
    %199 = vmatprep.subr.bf16.mxu0 0
    %200 = vmatpush1.bf16.msra.mxu0 0
    %201 = vmatprep.subr.bf16.mxu0 0
    %202 = vmatpush1.bf16.msra.mxu0 0
    %203 = vmatprep.subr.bf16.mxu0 0
    %204 = vmatpush1.bf16.msra.mxu0 0
    %205 = vmatprep.subr.bf16.mxu0 0
    %206 = vmatpush1.bf16.msra.mxu0 0
    %207 = vmatprep.subr.bf16.mxu0 0
    %208 = vmatpush1.bf16.msra.mxu0 0
    %209 = vmatprep.subr.bf16.mxu0 0
    %210 = vmatpush1.bf16.msra.mxu0 0
    %211 = vmatprep.subr.bf16.mxu0 0
    %212 = vmatpush1.bf16.msra.mxu0 0
    %213 = vmatprep.mubr.bf16.mxu0 0
    %214 = vmatmul.mubr.bf16.gmra.mrb[0].mxu0 %v175
    %v215 = vpop.f32.mrb[0].mxu0
    %v216 = vadd.f32 0.0, %v215
    %v217 = vpop.f32.mrb[0].mxu0
    %v218 = vpop.f32.mrb[0].mxu0
    %v219 = vpop.f32.mrb[0].mxu0
    %220 = vdwg.mxu0
    %v225 = vunpack.c.l.b16 %v154
    %v226 = vunpack.c.l.b16 %v155
    %v227 = vunpack.c.l.b16 %v156
    %v228 = vunpack.c.l.b16 %v157
    %v229 = vpack.c.b16 %v226, %v225
    %v230 = vpack.c.b16 %v228, %v227
    %v234 = vsel %vm105, %v158, 0
    %236 = vmatprep.subr.bf16.mxu0 0
    %237 = vmatpush1.bf16.msra.mxu0 %v229
    %238 = vmatprep.subr.bf16.mxu0 0
    %239 = vmatpush1.bf16.msra.mxu0 %v230
    %240 = vmatprep.subr.bf16.mxu0 0
    %241 = vmatpush1.bf16.msra.mxu0 0
    %242 = vmatprep.subr.bf16.mxu0 0
    %243 = vmatpush1.bf16.msra.mxu0 0
    %244 = vmatprep.subr.bf16.mxu0 0
    %245 = vmatpush1.bf16.msra.mxu0 0
    %246 = vmatprep.subr.bf16.mxu0 0
    %247 = vmatpush1.bf16.msra.mxu0 0
    %248 = vmatprep.subr.bf16.mxu0 0
    %249 = vmatpush1.bf16.msra.mxu0 0
    %250 = vmatprep.subr.bf16.mxu0 0
    %251 = vmatpush1.bf16.msra.mxu0 0
    %252 = vmatprep.subr.bf16.mxu0 0
    %253 = vmatpush1.bf16.msra.mxu0 0
    %254 = vmatprep.subr.bf16.mxu0 0
    %255 = vmatpush1.bf16.msra.mxu0 0
    %256 = vmatprep.subr.bf16.mxu0 0
    %257 = vmatpush1.bf16.msra.mxu0 0
    %258 = vmatprep.subr.bf16.mxu0 0
    %259 = vmatpush1.bf16.msra.mxu0 0
    %260 = vmatprep.subr.bf16.mxu0 0
    %261 = vmatpush1.bf16.msra.mxu0 0
    %262 = vmatprep.subr.bf16.mxu0 0
    %263 = vmatpush1.bf16.msra.mxu0 0
    %264 = vmatprep.subr.bf16.mxu0 0
    %265 = vmatpush1.bf16.msra.mxu0 0
    %266 = vmatprep.subr.bf16.mxu0 0
    %267 = vmatpush1.bf16.msra.mxu0 0
    %268 = vmatprep.mubr.bf16.mxu0 0
    %269 = vmatmul.mubr.bf16.gmra.mrb[0].mxu0 %v234
    %v270 = vpop.f32.mrb[0].mxu0
    %v271 = vadd.f32 %v216, %v270
    %v272 = vpop.f32.mrb[0].mxu0
    %v273 = vpop.f32.mrb[0].mxu0
    %v274 = vpop.f32.mrb[0].mxu0
    %275 = vdwg.mxu0
    %v276 = vld [vmem:[%s2 + $0xd4] sm:$0x2]
    %v277 = vunpack.c.l.bf16 %v276
    %v278 = vlaneseq
    %v279 = vshrl.u32 %v278, 7
    %v280 = vsub.s32 2, %v279
    %v281 = vrot.slane %v277, %v280
    %v282 = vadd.f32 %v271, %v281
    %v283 = vld [vmem:[%s2 + $0x34] sm:$0xf]
    %v284 = vld [vmem:[%s2 + $0x38] sm:$0xf]
    %v285 = vld [vmem:[%s2 + $0x3c] sm:$0xf]
    %v286 = vld [vmem:[%s2 + $0x40] sm:$0xf]
    %v287 = vpack.c.bf16 %v282, %v282
    %v288 = vlaneseq
    %v289 = vshrl.u32 %v288, 7
    %v290 = vsub.s32 3, %v289
    %v291 = vrot.slane %v277, %v290
    %v296 = vunpack.c.l.b16 %v283
    %v297 = vunpack.c.l.b16 %v284
    %v298 = vunpack.c.l.b16 %v285
    %v299 = vunpack.c.l.b16 %v286
    %v300 = vpack.c.b16 %v297, %v296
    %v301 = vpack.c.b16 %v299, %v298
    %v305 = vsel %vm105, %v287, 0
    %307 = vmatprep.subr.bf16.mxu0 0
    %308 = vmatpush1.bf16.msra.mxu0 %v300
    %309 = vmatprep.subr.bf16.mxu0 0
    %310 = vmatpush1.bf16.msra.mxu0 %v301
    %311 = vmatprep.subr.bf16.mxu0 0
    %312 = vmatpush1.bf16.msra.mxu0 0
    %313 = vmatprep.subr.bf16.mxu0 0
    %314 = vmatpush1.bf16.msra.mxu0 0
    %315 = vmatprep.subr.bf16.mxu0 0
    %316 = vmatpush1.bf16.msra.mxu0 0
    %317 = vmatprep.subr.bf16.mxu0 0
    %318 = vmatpush1.bf16.msra.mxu0 0
    %319 = vmatprep.subr.bf16.mxu0 0
    %320 = vmatpush1.bf16.msra.mxu0 0
    %321 = vmatprep.subr.bf16.mxu0 0
    %322 = vmatpush1.bf16.msra.mxu0 0
    %323 = vmatprep.subr.bf16.mxu0 0
    %324 = vmatpush1.bf16.msra.mxu0 0
    %325 = vmatprep.subr.bf16.mxu0 0
    %326 = vmatpush1.bf16.msra.mxu0 0
    %327 = vmatprep.subr.bf16.mxu0 0
    %328 = vmatpush1.bf16.msra.mxu0 0
    %329 = vmatprep.subr.bf16.mxu0 0
    %330 = vmatpush1.bf16.msra.mxu0 0
    %331 = vmatprep.subr.bf16.mxu0 0
    %332 = vmatpush1.bf16.msra.mxu0 0
    %333 = vmatprep.subr.bf16.mxu0 0
    %334 = vmatpush1.bf16.msra.mxu0 0
    %335 = vmatprep.subr.bf16.mxu0 0
    %336 = vmatpush1.bf16.msra.mxu0 0
    %337 = vmatprep.subr.bf16.mxu0 0
    %338 = vmatpush1.bf16.msra.mxu0 0
    %339 = vmatprep.mubr.bf16.mxu0 0
    %340 = vmatmul.mubr.bf16.gmra.mrb[0].mxu0 %v305
    %v341 = vpop.f32.mrb[0].mxu0
    %v342 = vadd.f32 %v291, %v341
    %v343 = vpop.f32.mrb[0].mxu0
    %v344 = vpop.f32.mrb[0].mxu0
    %v345 = vpop.f32.mrb[0].mxu0
    %346 = vdwg.mxu0
    %v347 = vld [vmem:[%s2 + $0xd4] sm:$0x4]
    %v348 = vunpack.c.l.bf16 %v347
    %v349 = vadd.f32 %v282, %v342
    %v350 = vsel %vm105, %v349, 0.0
    %351 = vadd.xlane.f32.xlu0 %v350
    %v352 = vpop.xlane.xlu0 %351
    %v353 = vrcp.pop 32.0
    %v354 = vmul.f32 %v352, %v353
    %v355 = vsub.f32 %v349, %v354
    %v356 = vmul.f32 %v355, %v355
    %v357 = vsel %vm105, %v356, 0.0
    %358 = vadd.xlane.f32.xlu0 %v357
    %v359 = vpop.xlane.xlu0 %358
    %v360 = vmul.f32 %v359, %v353
    %v361 = vadd.f32 %v360, 1e-05
    %v362 = vrsqrt.pop %v361
    %v363 = vmul.f32 %v355, %v362
    %v364 = vlaneseq
    %v365 = vshrl.u32 %v364, 7
    %v366 = vsub.s32 4, %v365
    %v367 = vrot.slane %v348, %v366
    %v368 = vmul.f32 %v363, %v367
    %v369 = vlaneseq
    %v370 = vshrl.u32 %v369, 7
    %v371 = vsub.s32 5, %v370
    %v372 = vrot.slane %v348, %v371
    %v373 = vadd.f32 %v368, %v372
    %v374 = vld [vmem:[%s3] sm:$0xf]
    %v375 = vld [vmem:[%s3 + $0x4] sm:$0xf]
    %v376 = vld [vmem:[%s3 + $0x8] sm:$0xf]
    %v377 = vld [vmem:[%s3 + $0xc] sm:$0xf]
    %v378 = vpack.c.bf16 %v373, %v373
    %v379 = vld [vmem:[%s3 + $0x30] sm:$0x1]
    %v380 = vunpack.c.l.bf16 %v379
    %v381 = vlaneseq
    %v382 = vshrl.u32 %v381, 7
    %v383 = vsub.s32 0, %v382
    %v384 = vrot.slane %v380, %v383
    %v389 = vunpack.c.l.b16 %v374
    %v390 = vunpack.c.l.b16 %v375
    %v391 = vunpack.c.l.b16 %v376
    %v392 = vunpack.c.l.b16 %v377
    %v393 = vpack.c.b16 %v390, %v389
    %v394 = vpack.c.b16 %v392, %v391
    %v398 = vsel %vm105, %v378, 0
    %400 = vmatprep.subr.bf16.mxu0 0
    %401 = vmatpush1.bf16.msra.mxu0 %v393
    %402 = vmatprep.subr.bf16.mxu0 0
    %403 = vmatpush1.bf16.msra.mxu0 %v394
    %404 = vmatprep.subr.bf16.mxu0 0
    %405 = vmatpush1.bf16.msra.mxu0 0
    %406 = vmatprep.subr.bf16.mxu0 0
    %407 = vmatpush1.bf16.msra.mxu0 0
    %408 = vmatprep.subr.bf16.mxu0 0
    %409 = vmatpush1.bf16.msra.mxu0 0
    %410 = vmatprep.subr.bf16.mxu0 0
    %411 = vmatpush1.bf16.msra.mxu0 0
    %412 = vmatprep.subr.bf16.mxu0 0
    %413 = vmatpush1.bf16.msra.mxu0 0
    %414 = vmatprep.subr.bf16.mxu0 0
    %415 = vmatpush1.bf16.msra.mxu0 0
    %416 = vmatprep.subr.bf16.mxu0 0
    %417 = vmatpush1.bf16.msra.mxu0 0
    %418 = vmatprep.subr.bf16.mxu0 0
    %419 = vmatpush1.bf16.msra.mxu0 0
    %420 = vmatprep.subr.bf16.mxu0 0
    %421 = vmatpush1.bf16.msra.mxu0 0
    %422 = vmatprep.subr.bf16.mxu0 0
    %423 = vmatpush1.bf16.msra.mxu0 0
    %424 = vmatprep.subr.bf16.mxu0 0
    %425 = vmatpush1.bf16.msra.mxu0 0
    %426 = vmatprep.subr.bf16.mxu0 0
    %427 = vmatpush1.bf16.msra.mxu0 0
    %428 = vmatprep.subr.bf16.mxu0 0
    %429 = vmatpush1.bf16.msra.mxu0 0
    %430 = vmatprep.subr.bf16.mxu0 0
    %431 = vmatpush1.bf16.msra.mxu0 0
    %432 = vmatprep.mubr.bf16.mxu0 0
    %433 = vmatmul.mubr.bf16.gmra.mrb[0].mxu0 %v398
    %v434 = vpop.f32.mrb[0].mxu0
    %v435 = vadd.f32 %v384, %v434
    %v436 = vpop.f32.mrb[0].mxu0
    %v437 = vpop.f32.mrb[0].mxu0
    %v438 = vpop.f32.mrb[0].mxu0
    %439 = vdwg.mxu0
    %v440 = vmul.f32 %v435, 0.5
    %v441 = vmul.f32 %v435, 0.70710677
    %v442 = verf.f32.pop %v441
    %v443 = vadd.f32 %v442, 1.0
    %v444 = vmul.f32 %v440, %v443
    %v445 = vld [vmem:[%s2 + $0x44] sm:$0xf]
    %v446 = vld [vmem:[%s2 + $0x48] sm:$0xf]
    %v447 = vld [vmem:[%s2 + $0x4c] sm:$0xf]
    %v448 = vld [vmem:[%s2 + $0x50] sm:$0xf]
    %v449 = vld [vmem:[%s2 + $0x54] sm:$0xf]
    %v450 = vld [vmem:[%s2 + $0x58] sm:$0xf]
    %v451 = vld [vmem:[%s2 + $0x5c] sm:$0xf]
    %v452 = vld [vmem:[%s2 + $0x60] sm:$0xf]
    %v453 = vld [vmem:[%s2 + $0x64] sm:$0xf]
    %v454 = vld [vmem:[%s2 + $0x68] sm:$0xf]
    %v455 = vld [vmem:[%s2 + $0x6c] sm:$0xf]
    %v456 = vld [vmem:[%s2 + $0x70] sm:$0xf]
    %v457 = vld [vmem:[%s2 + $0x74] sm:$0xf]
    %v458 = vld [vmem:[%s2 + $0x78] sm:$0xf]
    %v459 = vld [vmem:[%s2 + $0x7c] sm:$0xf]
    %v460 = vld [vmem:[%s2 + $0x80] sm:$0xf]
    %v461 = vpack.c.bf16 %v444, %v444
    %v462 = vld [vmem:[%s2 + $0xd4] sm:$0x8]
    %v463 = vunpack.c.l.bf16 %v462
    %v464 = vlaneseq
    %v465 = vshrl.u32 %v464, 7
    %v466 = vsub.s32 6, %v465
    %v467 = vrot.slane %v463, %v466
    %v484 = vunpack.c.l.b16 %v445
    %v485 = vunpack.c.l.b16 %v446
    %v486 = vunpack.c.l.b16 %v447
    %v487 = vunpack.c.l.b16 %v448
    %v488 = vunpack.c.l.b16 %v449
    %v489 = vunpack.c.l.b16 %v450
    %v490 = vunpack.c.l.b16 %v451
    %v491 = vunpack.c.l.b16 %v452
    %v492 = vunpack.c.l.b16 %v453
    %v493 = vunpack.c.l.b16 %v454
    %v494 = vunpack.c.l.b16 %v455
    %v495 = vunpack.c.l.b16 %v456
    %v496 = vunpack.c.l.b16 %v457
    %v497 = vunpack.c.l.b16 %v458
    %v498 = vunpack.c.l.b16 %v459
    %v499 = vunpack.c.l.b16 %v460
    %v500 = vpack.c.b16 %v485, %v484
    %v501 = vpack.c.b16 %v487, %v486
    %v502 = vpack.c.b16 %v489, %v488
    %v503 = vpack.c.b16 %v491, %v490
    %v504 = vpack.c.b16 %v493, %v492
    %v505 = vpack.c.b16 %v495, %v494
    %v506 = vpack.c.b16 %v497, %v496
    %v507 = vpack.c.b16 %v499, %v498
    %516 = vmatprep.subr.bf16.mxu0 0
    %517 = vmatpush1.bf16.msra.mxu0 %v500
    %518 = vmatprep.subr.bf16.mxu0 0
    %519 = vmatpush1.bf16.msra.mxu0 %v501
    %520 = vmatprep.subr.bf16.mxu0 0
    %521 = vmatpush1.bf16.msra.mxu0 %v502
    %522 = vmatprep.subr.bf16.mxu0 0
    %523 = vmatpush1.bf16.msra.mxu0 %v503
    %524 = vmatprep.subr.bf16.mxu0 0
    %525 = vmatpush1.bf16.msra.mxu0 %v504
    %526 = vmatprep.subr.bf16.mxu0 0
    %527 = vmatpush1.bf16.msra.mxu0 %v505
    %528 = vmatprep.subr.bf16.mxu0 0
    %529 = vmatpush1.bf16.msra.mxu0 %v506
    %530 = vmatprep.subr.bf16.mxu0 0
    %531 = vmatpush1.bf16.msra.mxu0 %v507
    %532 = vmatprep.subr.bf16.mxu0 0
    %533 = vmatpush1.bf16.msra.mxu0 0
    %534 = vmatprep.subr.bf16.mxu0 0
    %535 = vmatpush1.bf16.msra.mxu0 0
    %536 = vmatprep.subr.bf16.mxu0 0
    %537 = vmatpush1.bf16.msra.mxu0 0
    %538 = vmatprep.subr.bf16.mxu0 0
    %539 = vmatpush1.bf16.msra.mxu0 0
    %540 = vmatprep.subr.bf16.mxu0 0
    %541 = vmatpush1.bf16.msra.mxu0 0
    %542 = vmatprep.subr.bf16.mxu0 0
    %543 = vmatpush1.bf16.msra.mxu0 0
    %544 = vmatprep.subr.bf16.mxu0 0
    %545 = vmatpush1.bf16.msra.mxu0 0
    %546 = vmatprep.subr.bf16.mxu0 0
    %547 = vmatpush1.bf16.msra.mxu0 0
    %548 = vmatprep.mubr.bf16.mxu0 0
    %549 = vmatmul.mubr.bf16.gmra.mrb[0].mxu0 %v461
    %v550 = vpop.f32.mrb[0].mxu0
    %v551 = vadd.f32 %v467, %v550
    %v552 = vpop.f32.mrb[0].mxu0
    %v553 = vpop.f32.mrb[0].mxu0
    %v554 = vpop.f32.mrb[0].mxu0
    %555 = vdwg.mxu0
    %v556 = vld [vmem:[%s2 + $0xd8] sm:$0x1]
    %v557 = vunpack.c.l.bf16 %v556
    %v558 = vadd.f32 %v373, %v551
    %v559 = vsel %vm105, %v558, 0.0
    %560 = vadd.xlane.f32.xlu0 %v559
    %v561 = vpop.xlane.xlu0 %560
    %v562 = vmul.f32 %v561, %v353
    %v563 = vsub.f32 %v558, %v562
    %v564 = vmul.f32 %v563, %v563
    %v565 = vsel %vm105, %v564, 0.0
    %566 = vadd.xlane.f32.xlu0 %v565
    %v567 = vpop.xlane.xlu0 %566
    %v568 = vmul.f32 %v567, %v353
    %v569 = vadd.f32 %v568, 1e-05
    %v570 = vrsqrt.pop %v569
    %v571 = vmul.f32 %v563, %v570
    %v572 = vlaneseq
    %v573 = vshrl.u32 %v572, 7
    %v574 = vsub.s32 7, %v573
    %v575 = vrot.slane %v463, %v574
    %v576 = vmul.f32 %v571, %v575
    %v577 = vlaneseq
    %v578 = vshrl.u32 %v577, 7
    %v579 = vsub.s32 0, %v578
    %v580 = vrot.slane %v557, %v579
    %v581 = vadd.f32 %v576, %v580
    %v582 = vld [vmem:[%s2 + $0x84] sm:$0xf]
    %v583 = vld [vmem:[%s2 + $0x88] sm:$0xf]
    %v584 = vld [vmem:[%s2 + $0x8c] sm:$0xf]
    %v585 = vld [vmem:[%s2 + $0x90] sm:$0xf]
    %v586 = vpack.c.bf16 %v581, %v581
    %v587 = vlaneseq
    %v588 = vshrl.u32 %v587, 7
    %v589 = vsub.s32 1, %v588
    %v590 = vrot.slane %v557, %v589
    %v595 = vunpack.c.l.b16 %v582
    %v596 = vunpack.c.l.b16 %v583
    %v597 = vunpack.c.l.b16 %v584
    %v598 = vunpack.c.l.b16 %v585
    %v599 = vpack.c.b16 %v596, %v595
    %v600 = vpack.c.b16 %v598, %v597
    %v604 = vsel %vm105, %v586, 0
    %606 = vmatprep.subr.bf16.mxu0 0
    %607 = vmatpush1.bf16.msra.mxu0 %v599
    %608 = vmatprep.subr.bf16.mxu0 0
    %609 = vmatpush1.bf16.msra.mxu0 %v600
    %610 = vmatprep.subr.bf16.mxu0 0
    %611 = vmatpush1.bf16.msra.mxu0 0
    %612 = vmatprep.subr.bf16.mxu0 0
    %613 = vmatpush1.bf16.msra.mxu0 0
    %614 = vmatprep.subr.bf16.mxu0 0
    %615 = vmatpush1.bf16.msra.mxu0 0
    %616 = vmatprep.subr.bf16.mxu0 0
    %617 = vmatpush1.bf16.msra.mxu0 0
    %618 = vmatprep.subr.bf16.mxu0 0
    %619 = vmatpush1.bf16.msra.mxu0 0
    %620 = vmatprep.subr.bf16.mxu0 0
    %621 = vmatpush1.bf16.msra.mxu0 0
    %622 = vmatprep.subr.bf16.mxu0 0
    %623 = vmatpush1.bf16.msra.mxu0 0
    %624 = vmatprep.subr.bf16.mxu0 0
    %625 = vmatpush1.bf16.msra.mxu0 0
    %626 = vmatprep.subr.bf16.mxu0 0
    %627 = vmatpush1.bf16.msra.mxu0 0
    %628 = vmatprep.subr.bf16.mxu0 0
    %629 = vmatpush1.bf16.msra.mxu0 0
    %630 = vmatprep.subr.bf16.mxu0 0
    %631 = vmatpush1.bf16.msra.mxu0 0
    %632 = vmatprep.subr.bf16.mxu0 0
    %633 = vmatpush1.bf16.msra.mxu0 0
    %634 = vmatprep.subr.bf16.mxu0 0
    %635 = vmatpush1.bf16.msra.mxu0 0
    %636 = vmatprep.subr.bf16.mxu0 0
    %637 = vmatpush1.bf16.msra.mxu0 0
    %638 = vmatprep.mubr.bf16.mxu0 0
    %639 = vmatmul.mubr.bf16.gmra.mrb[0].mxu0 %v604
    %v640 = vpop.f32.mrb[0].mxu0
    %v641 = vadd.f32 %v590, %v640
    %v642 = vpop.f32.mrb[0].mxu0
    %v643 = vpop.f32.mrb[0].mxu0
    %v644 = vpop.f32.mrb[0].mxu0
    %645 = vdwg.mxu0
    %v646 = vld [vmem:[%s2 + $0xd8] sm:$0x2]
    %v647 = vunpack.c.l.bf16 %v646
    %v648 = vadd.f32 %v581, %v641
    %v649 = vsel %vm105, %v648, 0.0
    %650 = vadd.xlane.f32.xlu0 %v649
    %v651 = vpop.xlane.xlu0 %650
    %v652 = vmul.f32 %v651, %v353
    %v653 = vsub.f32 %v648, %v652
    %v654 = vmul.f32 %v653, %v653
    %v655 = vsel %vm105, %v654, 0.0
    %656 = vadd.xlane.f32.xlu0 %v655
    %v657 = vpop.xlane.xlu0 %656
    %v658 = vmul.f32 %v657, %v353
    %v659 = vadd.f32 %v658, 1e-05
    %v660 = vrsqrt.pop %v659
    %v661 = vmul.f32 %v653, %v660
    %v662 = vlaneseq
    %v663 = vshrl.u32 %v662, 7
    %v664 = vsub.s32 2, %v663
    %v665 = vrot.slane %v647, %v664
    %v666 = vmul.f32 %v661, %v665
    %v667 = vlaneseq
    %v668 = vshrl.u32 %v667, 7
    %v669 = vsub.s32 3, %v668
    %v670 = vrot.slane %v647, %v669
    %v671 = vadd.f32 %v666, %v670
    %v672 = vld [vmem:[%s3 + $0x10] sm:$0xf]
    %v673 = vld [vmem:[%s3 + $0x14] sm:$0xf]
    %v674 = vld [vmem:[%s3 + $0x18] sm:$0xf]
    %v675 = vld [vmem:[%s3 + $0x1c] sm:$0xf]
    %v676 = vpack.c.bf16 %v671, %v671
    %v677 = vlaneseq
    %v678 = vshrl.u32 %v677, 7
    %v679 = vsub.s32 1, %v678
    %v680 = vrot.slane %v380, %v679
    %v685 = vunpack.c.l.b16 %v672
    %v686 = vunpack.c.l.b16 %v673
    %v687 = vunpack.c.l.b16 %v674
    %v688 = vunpack.c.l.b16 %v675
    %v689 = vpack.c.b16 %v686, %v685
    %v690 = vpack.c.b16 %v688, %v687
    %v694 = vsel %vm105, %v676, 0
    %696 = vmatprep.subr.bf16.mxu0 0
    %697 = vmatpush1.bf16.msra.mxu0 %v689
    %698 = vmatprep.subr.bf16.mxu0 0
    %699 = vmatpush1.bf16.msra.mxu0 %v690
    %700 = vmatprep.subr.bf16.mxu0 0
    %701 = vmatpush1.bf16.msra.mxu0 0
    %702 = vmatprep.subr.bf16.mxu0 0
    %703 = vmatpush1.bf16.msra.mxu0 0
    %704 = vmatprep.subr.bf16.mxu0 0
    %705 = vmatpush1.bf16.msra.mxu0 0
    %706 = vmatprep.subr.bf16.mxu0 0
    %707 = vmatpush1.bf16.msra.mxu0 0
    %708 = vmatprep.subr.bf16.mxu0 0
    %709 = vmatpush1.bf16.msra.mxu0 0
    %710 = vmatprep.subr.bf16.mxu0 0
    %711 = vmatpush1.bf16.msra.mxu0 0
    %712 = vmatprep.subr.bf16.mxu0 0
    %713 = vmatpush1.bf16.msra.mxu0 0
    %714 = vmatprep.subr.bf16.mxu0 0
    %715 = vmatpush1.bf16.msra.mxu0 0
    %716 = vmatprep.subr.bf16.mxu0 0
    %717 = vmatpush1.bf16.msra.mxu0 0
    %718 = vmatprep.subr.bf16.mxu0 0
    %719 = vmatpush1.bf16.msra.mxu0 0
    %720 = vmatprep.subr.bf16.mxu0 0
    %721 = vmatpush1.bf16.msra.mxu0 0
    %722 = vmatprep.subr.bf16.mxu0 0
    %723 = vmatpush1.bf16.msra.mxu0 0
    %724 = vmatprep.subr.bf16.mxu0 0
    %725 = vmatpush1.bf16.msra.mxu0 0
    %726 = vmatprep.subr.bf16.mxu0 0
    %727 = vmatpush1.bf16.msra.mxu0 0
    %728 = vmatprep.mubr.bf16.mxu0 0
    %729 = vmatmul.mubr.bf16.gmra.mrb[0].mxu0 %v694
    %v730 = vpop.f32.mrb[0].mxu0
    %v731 = vadd.f32 %v680, %v730
    %v732 = vpop.f32.mrb[0].mxu0
    %v733 = vpop.f32.mrb[0].mxu0
    %v734 = vpop.f32.mrb[0].mxu0
    %735 = vdwg.mxu0
    %v736 = vmul.f32 %v731, 0.5
    %v737 = vmul.f32 %v731, 0.70710677
    %v738 = verf.f32.pop %v737
    %v739 = vadd.f32 %v738, 1.0
    %v740 = vmul.f32 %v736, %v739
    %v741 = vld [vmem:[%s2 + $0x94] sm:$0xf]
    %v742 = vld [vmem:[%s2 + $0x98] sm:$0xf]
    %v743 = vld [vmem:[%s2 + $0x9c] sm:$0xf]
    %v744 = vld [vmem:[%s2 + $0xa0] sm:$0xf]
    %v745 = vld [vmem:[%s2 + $0xa4] sm:$0xf]
    %v746 = vld [vmem:[%s2 + $0xa8] sm:$0xf]
    %v747 = vld [vmem:[%s2 + $0xac] sm:$0xf]
    %v748 = vld [vmem:[%s2 + $0xb0] sm:$0xf]
    %v749 = vld [vmem:[%s2 + $0xb4] sm:$0xf]
    %v750 = vld [vmem:[%s2 + $0xb8] sm:$0xf]
    %v751 = vld [vmem:[%s2 + $0xbc] sm:$0xf]
    %v752 = vld [vmem:[%s2 + $0xc0] sm:$0xf]
    %v753 = vld [vmem:[%s2 + $0xc4] sm:$0xf]
    %v754 = vld [vmem:[%s2 + $0xc8] sm:$0xf]
    %v755 = vld [vmem:[%s2 + $0xcc] sm:$0xf]
    %v756 = vld [vmem:[%s2 + $0xd0] sm:$0xf]
    %v757 = vpack.c.bf16 %v740, %v740
    %v758 = vld [vmem:[%s2 + $0xd8] sm:$0x4]
    %v759 = vunpack.c.l.bf16 %v758
    %v760 = vlaneseq
    %v761 = vshrl.u32 %v760, 7
    %v762 = vsub.s32 4, %v761
    %v763 = vrot.slane %v759, %v762
    %v780 = vunpack.c.l.b16 %v741
    %v781 = vunpack.c.l.b16 %v742
    %v782 = vunpack.c.l.b16 %v743
    %v783 = vunpack.c.l.b16 %v744
    %v784 = vunpack.c.l.b16 %v745
    %v785 = vunpack.c.l.b16 %v746
    %v786 = vunpack.c.l.b16 %v747
    %v787 = vunpack.c.l.b16 %v748
    %v788 = vunpack.c.l.b16 %v749
    %v789 = vunpack.c.l.b16 %v750
    %v790 = vunpack.c.l.b16 %v751
    %v791 = vunpack.c.l.b16 %v752
    %v792 = vunpack.c.l.b16 %v753
    %v793 = vunpack.c.l.b16 %v754
    %v794 = vunpack.c.l.b16 %v755
    %v795 = vunpack.c.l.b16 %v756
    %v796 = vpack.c.b16 %v781, %v780
    %v797 = vpack.c.b16 %v783, %v782
    %v798 = vpack.c.b16 %v785, %v784
    %v799 = vpack.c.b16 %v787, %v786
    %v800 = vpack.c.b16 %v789, %v788
    %v801 = vpack.c.b16 %v791, %v790
    %v802 = vpack.c.b16 %v793, %v792
    %v803 = vpack.c.b16 %v795, %v794
    %812 = vmatprep.subr.bf16.mxu0 0
    %813 = vmatpush1.bf16.msra.mxu0 %v796
    %814 = vmatprep.subr.bf16.mxu0 0
    %815 = vmatpush1.bf16.msra.mxu0 %v797
    %816 = vmatprep.subr.bf16.mxu0 0
    %817 = vmatpush1.bf16.msra.mxu0 %v798
    %818 = vmatprep.subr.bf16.mxu0 0
    %819 = vmatpush1.bf16.msra.mxu0 %v799
    %820 = vmatprep.subr.bf16.mxu0 0
    %821 = vmatpush1.bf16.msra.mxu0 %v800
    %822 = vmatprep.subr.bf16.mxu0 0
    %823 = vmatpush1.bf16.msra.mxu0 %v801
    %824 = vmatprep.subr.bf16.mxu0 0
    %825 = vmatpush1.bf16.msra.mxu0 %v802
    %826 = vmatprep.subr.bf16.mxu0 0
    %827 = vmatpush1.bf16.msra.mxu0 %v803
    %828 = vmatprep.subr.bf16.mxu0 0
    %829 = vmatpush1.bf16.msra.mxu0 0
    %830 = vmatprep.subr.bf16.mxu0 0
    %831 = vmatpush1.bf16.msra.mxu0 0
    %832 = vmatprep.subr.bf16.mxu0 0
    %833 = vmatpush1.bf16.msra.mxu0 0
    %834 = vmatprep.subr.bf16.mxu0 0
    %835 = vmatpush1.bf16.msra.mxu0 0
    %836 = vmatprep.subr.bf16.mxu0 0
    %837 = vmatpush1.bf16.msra.mxu0 0
    %838 = vmatprep.subr.bf16.mxu0 0
    %839 = vmatpush1.bf16.msra.mxu0 0
    %840 = vmatprep.subr.bf16.mxu0 0
    %841 = vmatpush1.bf16.msra.mxu0 0
    %842 = vmatprep.subr.bf16.mxu0 0
    %843 = vmatpush1.bf16.msra.mxu0 0
    %844 = vmatprep.mubr.bf16.mxu0 0
    %845 = vmatmul.mubr.bf16.gmra.mrb[0].mxu0 %v757
    %v846 = vpop.f32.mrb[0].mxu0
    %v847 = vadd.f32 %v763, %v846
    %v848 = vpop.f32.mrb[0].mxu0
    %v849 = vpop.f32.mrb[0].mxu0
    %v850 = vpop.f32.mrb[0].mxu0
    %851 = vdwg.mxu0
    %v852 = vadd.f32 %v671, %v847
    %v853 = vsel %vm105, %v852, 0.0
    %854 = vadd.xlane.f32.xlu0 %v853
    %v855 = vpop.xlane.xlu0 %854
    %v856 = vmul.f32 %v855, %v353
    %v857 = vsub.f32 %v852, %v856
    %v858 = vmul.f32 %v857, %v857
    %v859 = vsel %vm105, %v858, 0.0
    %860 = vadd.xlane.f32.xlu0 %v859
    %v861 = vpop.xlane.xlu0 %860
    %v862 = vmul.f32 %v861, %v353
    %v863 = vadd.f32 %v862, 1e-05
    %v864 = vrsqrt.pop %v863
    %v865 = vmul.f32 %v857, %v864
    %v866 = vld [vmem:[%s3 + $0x20] sm:$0xf]
    %v867 = vld [vmem:[%s3 + $0x24] sm:$0xf]
    %v868 = vld [vmem:[%s3 + $0x28] sm:$0xf]
    %v869 = vld [vmem:[%s3 + $0x2c] sm:$0xf]
    %v870 = vpack.c.bf16 %v865, %v865
    %v871 = vld [vmem:[%s3 + $0x30] sm:$0x2]
    %v872 = vunpack.c.l.bf16 %v871
    %v873 = vlaneseq
    %v874 = vshrl.u32 %v873, 7
    %v875 = vsub.s32 2, %v874
    %v876 = vrot.slane %v872, %v875
    %v881 = vunpack.c.l.b16 %v866
    %v882 = vunpack.c.l.b16 %v867
    %v883 = vunpack.c.l.b16 %v868
    %v884 = vunpack.c.l.b16 %v869
    %v885 = vpack.c.b16 %v882, %v881
    %v886 = vpack.c.b16 %v884, %v883
    %v890 = vsel %vm105, %v870, 0
    %892 = vmatprep.subr.bf16.mxu0 0
    %893 = vmatpush1.bf16.msra.mxu0 %v885
    %894 = vmatprep.subr.bf16.mxu0 0
    %895 = vmatpush1.bf16.msra.mxu0 %v886
    %896 = vmatprep.subr.bf16.mxu0 0
    %897 = vmatpush1.bf16.msra.mxu0 0
    %898 = vmatprep.subr.bf16.mxu0 0
    %899 = vmatpush1.bf16.msra.mxu0 0
    %900 = vmatprep.subr.bf16.mxu0 0
    %901 = vmatpush1.bf16.msra.mxu0 0
    %902 = vmatprep.subr.bf16.mxu0 0
    %903 = vmatpush1.bf16.msra.mxu0 0
    %904 = vmatprep.subr.bf16.mxu0 0
    %905 = vmatpush1.bf16.msra.mxu0 0
    %906 = vmatprep.subr.bf16.mxu0 0
    %907 = vmatpush1.bf16.msra.mxu0 0
    %908 = vmatprep.subr.bf16.mxu0 0
    %909 = vmatpush1.bf16.msra.mxu0 0
    %910 = vmatprep.subr.bf16.mxu0 0
    %911 = vmatpush1.bf16.msra.mxu0 0
    %912 = vmatprep.subr.bf16.mxu0 0
    %913 = vmatpush1.bf16.msra.mxu0 0
    %914 = vmatprep.subr.bf16.mxu0 0
    %915 = vmatpush1.bf16.msra.mxu0 0
    %916 = vmatprep.subr.bf16.mxu0 0
    %917 = vmatpush1.bf16.msra.mxu0 0
    %918 = vmatprep.subr.bf16.mxu0 0
    %919 = vmatpush1.bf16.msra.mxu0 0
    %920 = vmatprep.subr.bf16.mxu0 0
    %921 = vmatpush1.bf16.msra.mxu0 0
    %922 = vmatprep.subr.bf16.mxu0 0
    %923 = vmatpush1.bf16.msra.mxu0 0
    %924 = vmatprep.mubr.bf16.mxu0 0
    %925 = vmatmul.mubr.bf16.gmra.mrb[0].mxu0 %v890
    %v926 = vpop.f32.mrb[0].mxu0
    %v927 = vadd.f32 %v876, %v926
    %v928 = vpop.f32.mrb[0].mxu0
    %v929 = vpop.f32.mrb[0].mxu0
    %v930 = vpop.f32.mrb[0].mxu0
    %931 = vdwg.mxu0
    %932 = vst [vmem:[#allocation2] sm:$0xff] %v927
    // Predicated region
    $region18: #{tpu_custom_call.1} parent=1 // pred_check
      _
    $region19: #{tpu_custom_call.1} parent=1 // pred_check_branch
      %934 = sbr.rel (0) target = $region21
    $region20: #{tpu_custom_call.1} parent=1 // pred_region
      %s936 = ssub.s32 128, 128
      %937 = vsyncadd [#allocation3], %s936
      %s939 = sshll.u32 [#allocation2], 4
      %s940 = int_to_ptr.vmem [resolvable:$true] %s939
      %942 = dma.vmem_to_hbm [thread:$0]  %s940, 128, %s4, [#allocation3]
    $region21: #{tpu_custom_call.1} parent=1 // pred_fallthru
      _
    // Predicated region
    $region22: #{tpu_custom_call.1} parent=1 // pred_check
      _
    $region23: #{tpu_custom_call.1} parent=1 // pred_check_branch
      %944 = sbr.rel (0) target = $region25
    $region24: #{tpu_custom_call.1} parent=1 // pred_region
      %945 = dma.done [#allocation3], 128
    $region25: #{tpu_custom_call.1} parent=1 // pred_fallthru
      _
    %946 = vsyncpa [#allocation3], 1

</llo_original>
